<compile_context>
chip_gen: v7x
topology: tpu7x:2x2x1
jax: 0.10.0
libtpu: 0.0.40
codegen_flags: <defaults>
</compile_context>

<pallas_src>
import jax
import jax.numpy as jnp
from jax.experimental import pallas as pl
from jax.experimental.pallas import tpu as pltpu


def _chip_budgets():
    """(tile_bytes, vmem_limit_bytes) derived from the chip's VMEM capacity.

    v7x has 64 MiB VMEM per TensorCore (and much higher HBM bandwidth, so the
    ~0.35us fixed grid-step overhead is relatively larger -> bigger tiles);
    v5e / v6e have 128 MiB.
    """
    vmem_cap = 128 << 20
    try:
        info = pltpu.get_tpu_info()
        vmem_cap = int(getattr(info, "vmem_capacity_bytes", vmem_cap))
    except Exception:
        pass  # conservative fallback
    if vmem_cap <= (64 << 20):       # v7x-class
        # 4 live big buffers (x *2 + out *2) * 6 MiB = 24 MiB << 48 MiB limit.
        return 6 << 20, 48 << 20
    # v5e / v6e: 4 MiB tiles; explicit limit since v5e's scoped default is 16 MiB.
    return 4 << 20, 32 << 20


def _pick_lane_block(L, lane_cap):
    """Lane (last-dim) block: full rows when they fit the budget, otherwise the
    largest multiple of 128 <= lane_cap that divides L (no masked tail tile),
    falling back to the largest multiple of 128."""
    if L <= 128 or L <= lane_cap:
        return L
    cap = max(128, lane_cap - lane_cap % 128)
    b = cap
    while b >= 128:
        if L % b == 0:
            return b
        b -= 128
    return cap


def _pick_row_block(R, align, row_max):
    """Row (second-minor) block: a multiple of `align` <= row_max, preferring
    (a) an even number of row tiles (balanced across the 2 TensorCores of a
    v7x chip when that 'parallel' axis is sharded), then (b) no ragged tail,
    then (c) the largest block."""
    if R <= align:
        return R
    row_max = min(row_max, R)
    row_max -= row_max % align
    row_max = max(row_max, align)
    best, best_key = align, None
    b = row_max
    while b >= align:
        n = -(-R // b)                                   # number of row tiles
        balance = 2 if (n % 2 == 0) else (1 if n == 1 else 0)
        key = (balance, R % b == 0, b)
        if best_key is None or key > best_key:
            best, best_key = b, key
        b -= align
    return best


def _make_whiten_kernel(row_blk):
    def kernel(scale_ref, offset_ref, x_ref, o_ref):
        # scale_ref / offset_ref: (R_pad, 1) float32, resident for the whole call.
        # x_ref / o_ref:          (row_blk, lane_blk) in x.dtype.
        r0 = pl.multiple_of(pl.program_id(0) * row_blk, row_blk)
        s = scale_ref[pl.ds(r0, row_blk), :]
        b = offset_ref[pl.ds(r0, row_blk), :]
        # FMA in f32 (free: kernel is HBM-bound), cast only on the final store.
        o_ref[...] = (x_ref[...].astype(jnp.float32) * s + b).astype(o_ref.dtype)
    return kernel


def data_whiten(x, data_mean, data_std):
    """x: (N, C, H, W); data_mean/data_std: (C,). Returns (x - mean) / std."""
    N, C, H, W = x.shape
    assert data_mean.shape == (C,) and data_std.shape == (C,)
    assert jnp.issubdtype(x.dtype, jnp.floating), "data_whiten expects a float input"

    R, L = N * C, H * W
    x2 = x.reshape(R, L)
    itemsize = x.dtype.itemsize

    tile_bytes, vmem_limit = _chip_budgets()
    sub_align = max(8, 32 // itemsize)            # 8 (f32) / 16 (bf16) / 32 (int8)

    lane_cap = max(128, tile_bytes // (sub_align * itemsize))
    lane_blk = _pick_lane_block(L, lane_cap)
    row_max = max(sub_align, tile_bytes // (lane_blk * itemsize))
    row_blk = _pick_row_block(R, sub_align, row_max)

    n_row = pl.cdiv(R, row_blk)
    n_lane = pl.cdiv(L, lane_blk)
    r_pad = n_row * row_blk

    # Fold (x - m)/s into x*(1/s) + (-m/s); keep the fold in float32 so bf16
    # inputs don't lose precision in the constants. Row r has channel r % C.
    inv_std = 1.0 / data_std.astype(jnp.float32)
    neg_mean_over_std = -data_mean.astype(jnp.float32) * inv_std
    scale_rows = jnp.tile(inv_std, N)
    offset_rows = jnp.tile(neg_mean_over_std, N)
    if r_pad != R:  # keep the in-kernel pl.ds slices in bounds on a ragged tail
        scale_rows = jnp.concatenate(
            [scale_rows, jnp.ones((r_pad - R,), jnp.float32)])
        offset_rows = jnp.concatenate(
            [offset_rows, jnp.zeros((r_pad - R,), jnp.float32)])
    scale_rows = scale_rows.reshape(r_pad, 1)
    offset_rows = offset_rows.reshape(r_pad, 1)
    # TODO(synk): for extremely large N*C, pass the (C,) vectors via
    # PrefetchScalarGridSpec/SMEM instead of lane-padded resident columns.

    out = pl.pallas_call(
        _make_whiten_kernel(row_blk),
        out_shape=jax.ShapeDtypeStruct((R, L), x.dtype),
        grid=(n_row, n_lane),
        in_specs=[
            # Constant index_map -> loaded once, resident in VMEM (no per-tile DMA).
            pl.BlockSpec((r_pad, 1), lambda i, j: (0, 0)),    # scale
            pl.BlockSpec((r_pad, 1), lambda i, j: (0, 0)),    # offset
            pl.BlockSpec((row_blk, lane_blk), lambda i, j: (i, j)),   # x
        ],
        out_specs=pl.BlockSpec((row_blk, lane_blk), lambda i, j: (i, j)),
        compiler_params=pltpu.CompilerParams(
            dimension_semantics=("parallel", "parallel"),
            vmem_limit_bytes=vmem_limit,
        ),
        # TODO(synk): emit a bf16 output / fuse into the consumer when allowed —
        # halving write bytes is the only remaining lever for this mem-bound op.
        # TODO(synk): pass input_output_aliases={2: 0} when the caller no longer
        # needs x, to reuse its HBM buffer.
    )(scale_rows, offset_rows, x2)

    return out.reshape(N, C, H, W)


if __name__ == "__main__":
    key = jax.random.PRNGKey(0)

    # Module __init__ reshapes the buffers to (3, 1, 1) -> C = 3.
    data_mean = jnp.asarray([0.485, 0.456, 0.406], dtype=jnp.float32)
    data_std = jnp.asarray([0.229, 0.224, 0.225], dtype=jnp.float32)

    # Small NCHW input consistent with the forward pass: batch=2, C=3, 16x16.
    x = jax.random.normal(key, (2, 3, 16, 16), dtype=jnp.float32)

    out = jax.block_until_ready(data_whiten(x, data_mean, data_std))

    # Pure-JAX reference (broadcasting mean/std as (3,1,1), like PyTorch).
    ref = (x - data_mean.reshape(3, 1, 1)) / data_std.reshape(3, 1, 1)
    assert out.shape == x.shape and out.dtype == x.dtype
    # Kernel uses the algebraically-equivalent x*(1/s) + (-m/s) fold in f32,
    # so allow a couple of f32 ulps vs the subtract-then-divide reference.
    assert jnp.allclose(out, ref, atol=1e-5, rtol=1e-5)

    print("KERNEL_OK")
</pallas_src>

<mosaic_0001>
module attributes {stable_mosaic.version = 11 : i64} {
  func.func @kernel(%arg0: i32, %arg1: i32, %arg2: memref<6x1xf32, #tpu.memory_space<vmem>>, %arg3: memref<6x1xf32, #tpu.memory_space<vmem>>, %arg4: memref<6x256xf32, #tpu.memory_space<vmem>>, %arg5: memref<6x256xf32, #tpu.memory_space<vmem>>) attributes {dimension_semantics = [#tpu.dimension_semantics<parallel>, #tpu.dimension_semantics<parallel>], iteration_bounds = array<i64: 1, 1>, scalar_prefetch = 0 : i64, scratch_operands = 0 : i64, tpu.core_type = #tpu.core_type<tc>, window_params = [{pipeline_mode = #tpu.pipeline_mode<synchronous>, transform_indices = @transform_0, window_bounds = array<i64: 6, 1>}, {pipeline_mode = #tpu.pipeline_mode<synchronous>, transform_indices = @transform_1, window_bounds = array<i64: 6, 1>}, {transform_indices = @transform_2, window_bounds = array<i64: 6, 256>}, {transform_indices = @transform_3, window_bounds = array<i64: 6, 256>}]} {
    %c6_i32 = arith.constant 6 : i32
    %0 = arith.muli %arg0, %c6_i32 : i32
    %1 = tpu.assume_multiple %0, 6 : i32
    %2 = arith.index_cast %1 : i32 to index
    %c0 = arith.constant 0 : index
    %3 = vector.load %arg2[%2, %c0] : memref<6x1xf32, #tpu.memory_space<vmem>>, vector<6x1xf32>
    %4 = arith.index_cast %1 : i32 to index
    %c0_0 = arith.constant 0 : index
    %5 = vector.load %arg3[%4, %c0_0] : memref<6x1xf32, #tpu.memory_space<vmem>>, vector<6x1xf32>
    %c0_1 = arith.constant 0 : index
    %c0_2 = arith.constant 0 : index
    %6 = vector.load %arg4[%c0_1, %c0_2] : memref<6x256xf32, #tpu.memory_space<vmem>>, vector<6x256xf32>
    %7 = vector.broadcast %3 : vector<6x1xf32> to vector<6x256xf32>
    %8 = arith.mulf %6, %7 : vector<6x256xf32>
    %9 = vector.broadcast %5 : vector<6x1xf32> to vector<6x256xf32>
    %10 = arith.addf %8, %9 : vector<6x256xf32>
    %c0_3 = arith.constant 0 : index
    %c0_4 = arith.constant 0 : index
    %11 = vector.load %arg5[%c0_3, %c0_4] : memref<6x256xf32, #tpu.memory_space<vmem>>, vector<6x256xf32>
    tpu.vector_store %arg5[%c0_3, %c0_4], %10 {strides = array<i32>} : memref<6x256xf32, #tpu.memory_space<vmem>>, vector<6x256xf32>,
    return
  }
  func.func @transform_0(%arg0: i32, %arg1: i32) -> (i32, i32) {
    %c0_i32 = arith.constant 0 : i32
    %c0_i32_0 = arith.constant 0 : i32
    %c0_i32_1 = arith.constant 0 : i32
    return %c0_i32, %c0_i32_0 : i32, i32
  }
  func.func @transform_1(%arg0: i32, %arg1: i32) -> (i32, i32) {
    %c0_i32 = arith.constant 0 : i32
    %c0_i32_0 = arith.constant 0 : i32
    %c0_i32_1 = arith.constant 0 : i32
    return %c0_i32, %c0_i32_0 : i32, i32
  }
  func.func @transform_2(%arg0: i32, %arg1: i32) -> (i32, i32) {
    %c0_i32 = arith.constant 0 : i32
    return %arg0, %arg1 : i32, i32
  }
  func.func @transform_3(%arg0: i32, %arg1: i32) -> (i32, i32) {
    %c0_i32 = arith.constant 0 : i32
    return %arg0, %arg1 : i32, i32
  }
}

</mosaic_0001>

<llo_original>
// kernel: tpu_custom_call.1
$region0: #{tpu_custom_call.1}
  #allocation0 [shape = 'u32[]', space=smem, size = 0x4, offset = 0x4, fixed_abs, tag = 'smem constant byte address 0x4 - core index']
  #allocation1 [shape = 'u32[144,128]{1,0:T(1,128)}', space=vmem, size = 0x12000, scoped, tag = 'internal scratch']
  %s0 = inlined_call_operand.vmem [shape: f32[6,1], index: 0, kind: input, shape index: {}]
  %s1 = inlined_call_operand.vmem [shape: f32[6,1], index: 1, kind: input, shape index: {}]
  %s2 = inlined_call_operand.vmem [shape: f32[6,256], index: 2, kind: input, shape index: {}]
  %s3 = inlined_call_operand.hbm [shape: f32[6,256], index: 3, kind: output, shape index: {}]
  %s4 = sld [smem:[#allocation0]]
  $region22: #{tpu_custom_call.1} parent=0
    _
  %s6 = ssub.s32 1, %s4
  %s7 = scalar_select 0, %s6, %s4
  $region1: #{tpu_custom_call.1} parent=0
    #allocation2 [shape = 'u8[8192]{0}', space=vmem, size = 0x2000, scoped, tag = 'output window, operand 0, single buffered']
    #allocation3 [shape = 's32[1]{0}', space=sflag, size = 0x4, scoped, tag = 'scoped memory for tpu_custom_call.1']
    %8 = vsyncpa [#allocation3], 0
    // Predicated region
    $region2: #{tpu_custom_call.1} parent=1 // pred_check
      _
    $region3: #{tpu_custom_call.1} parent=1 // pred_check_branch
      %10 = sbr.rel (0) target = $region5
    $region4: #{tpu_custom_call.1} parent=1 // pred_region
      _
    $region5: #{tpu_custom_call.1} parent=1 // pred_fallthru
      _
    // Predicated region
    $region6: #{tpu_custom_call.1} parent=1 // pred_check
      _
    $region7: #{tpu_custom_call.1} parent=1 // pred_check_branch
      %12 = sbr.rel (0) target = $region9
    $region8: #{tpu_custom_call.1} parent=1 // pred_region
      _
    $region9: #{tpu_custom_call.1} parent=1 // pred_fallthru
      _
    // Predicated region
    $region10: #{tpu_custom_call.1} parent=1 // pred_check
      _
    $region11: #{tpu_custom_call.1} parent=1 // pred_check_branch
      %14 = sbr.rel (0) target = $region13
    $region12: #{tpu_custom_call.1} parent=1 // pred_region
      _
    $region13: #{tpu_custom_call.1} parent=1 // pred_fallthru
      _
    %s15 = smul.u32 0, 6
    %s16 = scalar_lea.vmem %s0, %s15
    %v17 = vld [vmem:[%s16] sm:$0x3f]
    %s18 = scalar_lea.vmem %s1, %s15
    %v19 = vld [vmem:[%s18] sm:$0x3f]
    %v20 = vld [vmem:[%s2] sm:$0x3f]
    %v21 = vld [vmem:[%s2 + $0x8] sm:$0x3f]
    %23 = vset.pattern.permute.xlu0 0
    %24 = vperm.xlu0 %23, %v17
    %v25 = vpop.permute.xlu0 %24
    %v27 = vmul.f32 %v20, %v25
    %v28 = vmul.f32 %v21, %v25
    %30 = vset.pattern.permute.xlu0 0
    %31 = vperm.xlu0 %30, %v19
    %v32 = vpop.permute.xlu0 %31
    %v34 = vadd.f32 %v27, %v32
    %v35 = vadd.f32 %v28, %v32
    %36 = vst [vmem:[#allocation2] sm:$0x3f] %v34
    %37 = vst [vmem:[#allocation2 + $0x8] sm:$0x3f] %v35
    // Predicated region
    $region14: #{tpu_custom_call.1} parent=1 // pred_check
      _
    $region15: #{tpu_custom_call.1} parent=1 // pred_check_branch
      %39 = sbr.rel (0) target = $region17
    $region16: #{tpu_custom_call.1} parent=1 // pred_region
      %s41 = ssub.s32 256, 256
      %42 = vsyncadd [#allocation3], %s41
      %s44 = sshll.u32 [#allocation2], 4
      %s45 = int_to_ptr.vmem [resolvable:$true] %s44
      %47 = dma.vmem_to_hbm [thread:$0]  %s45, 256, %s3, [#allocation3]
    $region17: #{tpu_custom_call.1} parent=1 // pred_fallthru
      _
    // Predicated region
    $region18: #{tpu_custom_call.1} parent=1 // pred_check
      _
    $region19: #{tpu_custom_call.1} parent=1 // pred_check_branch
      %49 = sbr.rel (0) target = $region21
    $region20: #{tpu_custom_call.1} parent=1 // pred_region
      %50 = dma.done [#allocation3], 256
    $region21: #{tpu_custom_call.1} parent=1 // pred_fallthru
      _
    %51 = vsyncpa [#allocation3], 1

</llo_original>
